<compile_context>
chip_gen: v6e
topology: v6e:2x2x1
jax: 0.10.0
libtpu: 0.0.40
codegen_flags: <defaults>
</compile_context>

<pallas_src>
from functools import partial

import numpy as np
import jax
import jax.numpy as jnp
from jax import lax
from jax.experimental import pallas as pl
from jax.experimental.pallas import tpu as pltpu


# ----------------------------- config ---------------------------------------
class Config:
    hidden_size = 32
    intermediate_size = 64
    moe_intermediate_size = 64
    n_routed_experts = 4
    num_experts_per_tok = 2
    n_shared_experts = 2
    hidden_act = "relu"            # ACT2FN['relu'] for this synthetic config
    norm_topk_prob = True
    router_temperature_init = 1.0
    pretraining_tp = 1


def _make_act(name):
    if name == "relu":
        return lambda x: jnp.maximum(x, 0.0)
    if name == "gelu":
        return jax.nn.gelu
    if name == "tanh":
        return jnp.tanh
    raise ValueError(f"unsupported hidden_act {name}")


# --------------------------- fused Pallas kernel ------------------------------
def fused_moe_kernel(x_ref, tlog_ref, bigw_ref, rcw_ref, expand_ref, down_ref,
                     o_ref,
                     *, temperature, n_experts, inter, n_topk, norm_topk,
                     shared_inter, act_name, compute_dtype, router_in_big):
    act = _make_act(act_name)
    E, I, K, Is = n_experts, inter, n_topk, shared_inter
    EI = E * I

    x = x_ref[...].astype(jnp.float32)                       # [Tb, D]
    xc = x.astype(compute_dtype)

    # -------- ONE stacked projection: [wgu | swgu (| router | comb)] ---------
    big = jnp.dot(xc, bigw_ref[...],
                  preferred_element_type=jnp.float32)         # [Tb, Wbig]
    hgu = big[:, :2 * EI]                                     # [Tb, 2*E*I]
    sgu = big[:, 2 * EI:2 * EI + 2 * Is]                      # [Tb, 2*Is]

    if router_in_big:
        off = 2 * EI + 2 * Is
        rlog = big[:, off:off + E]                            # [Tb, E]
        clog = big[:, off + E:off + E + 2]                    # [Tb, 2]
    else:
        # compute_dtype lowered: keep router / combination gate in f32
        rc = jnp.dot(x, rcw_ref[...], preferred_element_type=jnp.float32)
        rlog = rc[:, :E]
        clog = rc[:, E:E + 2]

    # ---------------- router softmax (task_emb folded in as bias) ------------
    logits = (rlog + tlog_ref[...]) / temperature
    m = jnp.max(logits, axis=-1, keepdims=True)
    ex = jnp.exp(logits - m)
    scores = ex / jnp.sum(ex, axis=-1, keepdims=True)         # f32 [Tb, E]

    # ------- in-kernel top-k: K unrolled passes, lowest-index tie break ------
    col = lax.broadcasted_iota(jnp.int32, scores.shape, 1)
    sel = jnp.zeros_like(scores)                              # 0/1 float mask
    for _ in range(K):
        masked = scores - sel * jnp.float32(1e30)             # hide picked
        mmax = jnp.max(masked, axis=-1, keepdims=True)
        first = jnp.min(jnp.where(masked == mmax, col, E),
                        axis=-1, keepdims=True)               # first argmax idx
        sel = sel + (col == first).astype(scores.dtype)
    topk = scores * sel                                       # [Tb, E]
    if norm_topk:
        dense_r = topk / (jnp.sum(topk, axis=-1, keepdims=True) + 1e-20)
    else:
        dense_r = topk

    # --------- combination gate folded into the routing / shared paths -------
    cm = jnp.max(clog, axis=-1, keepdims=True)
    cex = jnp.exp(clog - cm)
    alpha = cex / jnp.sum(cex, axis=-1, keepdims=True)        # [Tb, 2]
    dense_r = dense_r * alpha[:, 0:1]                         # local path scale

    # expand per-expert weight along its I lanes with one MXU push
    w_rep = jnp.dot(dense_r, expand_ref[...],
                    preferred_element_type=jnp.float32)       # [Tb, E*I]

    # ------------- experts: act(g)*u, weight, ONE stacked down-proj ----------
    g = hgu[:, :EI]
    u = hgu[:, EI:]
    wh = act(g) * u * w_rep                                   # [Tb, E*I]
    sg = sgu[:, :Is]
    su = sgu[:, Is:]
    sh = act(sg) * su * alpha[:, 1:2]                         # [Tb, Is]
    cat = jnp.concatenate([wh, sh], axis=1).astype(compute_dtype)  # [Tb, EI+Is]

    out = jnp.dot(cat, down_ref[...],
                  preferred_element_type=jnp.float32)         # [Tb, D]
    o_ref[...] = out.astype(o_ref.dtype)


# ------------------------------ wrapper ---------------------------------------
def deepseek_moe_forward(hidden_states, task_id, params, config,
                         compute_dtype=jnp.float32):
    B, S, D = hidden_states.shape
    T = B * S
    E = config.n_routed_experts
    K = config.num_experts_per_tok
    I = config.moe_intermediate_size
    EI = E * I

    x = hidden_states.reshape(T, D).astype(jnp.float32)

    # -------- one-time weight layout prep (pure plumbing, outside kernel) ----
    temb_row = params["task_emb"][task_id][None, :].astype(jnp.float32)    # [1,D]
    rw = params["router_w"].T.astype(jnp.float32)                          # [D,E]
    cw = params["comb_w"].astype(jnp.float32)                              # [D,2]
    # task-emb contribution to router logits (constant bias row per call)
    temb_logits = jnp.dot(temb_row, rw)                                    # [1,E]

    wg = params["local_wg"][task_id]                                       # [E,D,I]
    wu = params["local_wu"][task_id]
    wd = params["local_wd"][task_id]                                       # [E,I,D]
    wg_flat = jnp.transpose(wg, (1, 0, 2)).reshape(D, EI)
    wu_flat = jnp.transpose(wu, (1, 0, 2)).reshape(D, EI)
    wgu = jnp.concatenate([wg_flat, wu_flat], axis=1)                      # [D,2EI]
    wd_flat = wd.reshape(EI, D)                                            # [EI,D]

    Is = params["shared_wg"].shape[-1]
    swgu = jnp.concatenate([params["shared_wg"], params["shared_wu"]],
                           axis=1).astype(jnp.float32)                     # [D,2Is]
    swd = params["shared_wd"].astype(jnp.float32)                          # [Is,D]

    router_in_big = (np.dtype(compute_dtype) == np.dtype(np.float32))
    blocks = [wgu, swgu] + ([rw, cw] if router_in_big else [])
    bigw = jnp.concatenate(blocks, axis=1).astype(compute_dtype)           # [D,Wbig]
    Wbig = 2 * EI + 2 * Is + (E + 2 if router_in_big else 0)
    rcw = jnp.concatenate([rw, cw], axis=1)                                # [D,E+2] f32

    # 0/1 block matrix: dense_r [Tb,E] @ expand [E,EI] broadcasts routing
    # weights across each expert's I lanes (single MXU push).
    expand = (jnp.arange(E)[:, None] ==
              (jnp.arange(EI)[None, :] // I)).astype(jnp.float32)          # [E,EI]
    down = jnp.concatenate([wd_flat, swd], axis=0).astype(compute_dtype)   # [EI+Is,D]

    # ------------- token tiling: big tile, pad to a tile multiple ------------
    # Tb <= 512 keeps all f32 intermediates well inside v5e's 16 MiB scoped
    # VMEM default (and trivially inside v6e/v7x budgets).
    Tb = min(512, ((T + 7) // 8) * 8)
    Tp = pl.cdiv(T, Tb) * Tb
    if Tp != T:
        x = jnp.pad(x, ((0, Tp - T), (0, 0)))
    grid = (Tp // Tb,)

    kernel = partial(
        fused_moe_kernel,
        temperature=float(getattr(config, "router_temperature_init", 1.0)),
        n_experts=E, inter=I, n_topk=K,
        norm_topk=bool(getattr(config, "norm_topk_prob", True)),
        shared_inter=Is,
        act_name=config.hidden_act,
        compute_dtype=compute_dtype,
        router_in_big=router_in_big,
    )

    flops = 2 * Tp * D * Wbig + 2 * Tp * E * EI + 2 * Tp * (EI + Is) * D
    if not router_in_big:
        flops += 2 * Tp * D * (E + 2)
    cost = pl.CostEstimate(
        flops=flops,
        transcendentals=Tp * (E + 2),
        bytes_accessed=4 * (2 * Tp * D + D * Wbig + D * (E + 2)
                            + E * EI + (EI + Is) * D + E),
    )

    const = lambda i: (0, 0)
    out = pl.pallas_call(
        kernel,
        out_shape=jax.ShapeDtypeStruct((Tp, D), jnp.float32),
        grid=grid,
        in_specs=[
            pl.BlockSpec((Tb, D), lambda i: (i, 0)),       # x (tokens tiled)
            pl.BlockSpec((1, E), const),                   # task-emb router bias
            pl.BlockSpec((D, Wbig), const),                # stacked projections
            pl.BlockSpec((D, E + 2), const),               # f32 router|comb (bf16 path)
            pl.BlockSpec((E, EI), const),                  # one-hot expand
            pl.BlockSpec((EI + Is, D), const),             # stacked down-proj
        ],
        out_specs=pl.BlockSpec((Tb, D), lambda i: (i, 0)),
        compiler_params=pltpu.CompilerParams(
            dimension_semantics=("parallel",)),
        cost_estimate=cost,
    )(x, temb_logits, bigw, rcw, expand, down)

    return out[:T].reshape(B, S, D)


# ------------------------- pure-JAX reference (f32) ---------------------------
def reference_forward(hidden_states, task_id, params, config):
    B, S, D = hidden_states.shape
    T = B * S
    E = config.n_routed_experts
    K = config.num_experts_per_tok
    act = _make_act(config.hidden_act)
    hp = jax.lax.Precision.HIGHEST
    x = hidden_states.reshape(T, D).astype(jnp.float32)

    gate_in = x + params["task_emb"][task_id][None, :]
    logits = jnp.dot(gate_in, params["router_w"].T, precision=hp)
    logits = logits / config.router_temperature_init
    scores = jax.nn.softmax(logits, axis=-1)
    vals, idx = jax.lax.top_k(scores, K)
    if config.norm_topk_prob:
        vals = vals / (jnp.sum(vals, axis=-1, keepdims=True) + 1e-20)
    dense_r = jnp.zeros((T, E), jnp.float32).at[
        jnp.arange(T)[:, None], idx].add(vals)

    wg = params["local_wg"][task_id]
    wu = params["local_wu"][task_id]
    wd = params["local_wd"][task_id]
    local = jnp.zeros((T, D), jnp.float32)
    for e in range(E):
        h = act(jnp.dot(x, wg[e], precision=hp)) * jnp.dot(x, wu[e], precision=hp)
        local = local + dense_r[:, e:e + 1] * jnp.dot(h, wd[e], precision=hp)

    sh = act(jnp.dot(x, params["shared_wg"], precision=hp)) * \
        jnp.dot(x, params["shared_wu"], precision=hp)
    shared = jnp.dot(sh, params["shared_wd"], precision=hp)

    alpha = jax.nn.softmax(jnp.dot(x, params["comb_w"], precision=hp), axis=-1)
    out = alpha[:, 0:1] * local + alpha[:, 1:2] * shared
    return out.reshape(B, S, D)


# --------------------------- parameter init -----------------------------------
def init_params(key, config, num_tasks):
    D = config.hidden_size
    E = config.n_routed_experts
    I = config.moe_intermediate_size
    Is = I * config.n_shared_experts if config.n_shared_experts > 1 else I
    ks = jax.random.split(key, 9)
    s = 0.05
    return {
        "task_emb":  jax.random.normal(ks[0], (num_tasks, D), jnp.float32) * s,
        "router_w":  jax.random.normal(ks[1], (E, D), jnp.float32) * s,
        "local_wg":  jax.random.normal(ks[2], (num_tasks, E, D, I), jnp.float32) * s,
        "local_wu":  jax.random.normal(ks[3], (num_tasks, E, D, I), jnp.float32) * s,
        "local_wd":  jax.random.normal(ks[4], (num_tasks, E, I, D), jnp.float32) * s,
        "shared_wg": jax.random.normal(ks[5], (D, Is), jnp.float32) * s,
        "shared_wu": jax.random.normal(ks[6], (D, Is), jnp.float32) * s,
        "shared_wd": jax.random.normal(ks[7], (Is, D), jnp.float32) * s,
        "comb_w":    jax.random.normal(ks[8], (D, 2), jnp.float32) * s,
    }


if __name__ == "__main__":
    cfg = Config()
    num_tasks = 3
    task_id = 1

    key = jax.random.PRNGKey(0)
    kx, kp = jax.random.split(key)
    B, S, D = 2, 8, cfg.hidden_size
    hidden_states = jax.random.normal(kx, (B, S, D), jnp.float32)
    params = init_params(kp, cfg, num_tasks)

    out = deepseek_moe_forward(hidden_states, task_id, params, cfg)
    out = jax.block_until_ready(out)
    assert out.shape == (B, S, D) and out.dtype == jnp.float32

    ref = reference_forward(hidden_states, task_id, params, cfg)
    err = float(jnp.max(jnp.abs(out - ref)))
    assert err < 2e-2, f"kernel/reference mismatch, max abs err = {err}"

    print("KERNEL_OK")
</pallas_src>

<mosaic_0001>
module attributes {stable_mosaic.version = 11 : i64} {
  func.func @fused_moe_kernel(%arg0: i32, %arg1: memref<16x32xf32, #tpu.memory_space<vmem>>, %arg2: memref<1x4xf32, #tpu.memory_space<vmem>>, %arg3: memref<32x774xf32, #tpu.memory_space<vmem>>, %arg4: memref<32x6xf32, #tpu.memory_space<vmem>>, %arg5: memref<4x256xf32, #tpu.memory_space<vmem>>, %arg6: memref<384x32xf32, #tpu.memory_space<vmem>>, %arg7: memref<16x32xf32, #tpu.memory_space<vmem>>) attributes {dimension_semantics = [#tpu.dimension_semantics<parallel>], iteration_bounds = array<i64: 1>, scalar_prefetch = 0 : i64, scratch_operands = 0 : i64, tpu.core_type = #tpu.core_type<tc>, window_params = [{transform_indices = @transform_0, window_bounds = array<i64: 16, 32>}, {pipeline_mode = #tpu.pipeline_mode<synchronous>, transform_indices = @transform_1, window_bounds = array<i64: 1, 4>}, {pipeline_mode = #tpu.pipeline_mode<synchronous>, transform_indices = @transform_2, window_bounds = array<i64: 32, 774>}, {pipeline_mode = #tpu.pipeline_mode<synchronous>, transform_indices = @transform_3, window_bounds = array<i64: 32, 6>}, {pipeline_mode = #tpu.pipeline_mode<synchronous>, transform_indices = @transform_4, window_bounds = array<i64: 4, 256>}, {pipeline_mode = #tpu.pipeline_mode<synchronous>, transform_indices = @transform_5, window_bounds = array<i64: 384, 32>}, {transform_indices = @transform_6, window_bounds = array<i64: 16, 32>}]} {
    %c0 = arith.constant 0 : index
    %c0_0 = arith.constant 0 : index
    %0 = vector.load %arg1[%c0, %c0_0] : memref<16x32xf32, #tpu.memory_space<vmem>>, vector<16x32xf32>
    %c0_1 = arith.constant 0 : index
    %c0_2 = arith.constant 0 : index
    %1 = vector.load %arg3[%c0_1, %c0_2] : memref<32x774xf32, #tpu.memory_space<vmem>>, vector<32x774xf32>
    %cst = arith.constant dense<0.000000e+00> : vector<16x774xf32>
    %2 = tpu.matmul %0, %1, %cst {dimension_numbers = #tpu.dot_dimension_numbers<[1], [0], [0], [1], [0, 0, 1, 1], [], []>} : vector<16x32xf32>, vector<32x774xf32>, vector<16x774xf32> -> vector<16x774xf32>
    %3 = vector.extract_strided_slice %2 {offsets = [0, 0], sizes = [16, 512], strides = [1, 1]} : vector<16x774xf32> to vector<16x512xf32>
    %4 = vector.extract_strided_slice %2 {offsets = [0, 512], sizes = [16, 256], strides = [1, 1]} : vector<16x774xf32> to vector<16x256xf32>
    %5 = vector.extract_strided_slice %2 {offsets = [0, 768], sizes = [16, 4], strides = [1, 1]} : vector<16x774xf32> to vector<16x4xf32>
    %6 = vector.extract_strided_slice %2 {offsets = [0, 772], sizes = [16, 2], strides = [1, 1]} : vector<16x774xf32> to vector<16x2xf32>
    %c0_3 = arith.constant 0 : index
    %c0_4 = arith.constant 0 : index
    %7 = vector.load %arg2[%c0_3, %c0_4] : memref<1x4xf32, #tpu.memory_space<vmem>>, vector<1x4xf32>
    %8 = vector.broadcast %7 : vector<1x4xf32> to vector<16x4xf32>
    %9 = arith.addf %5, %8 : vector<16x4xf32>
    %cst_5 = arith.constant 1.000000e+00 : f32
    %10 = vector.broadcast %cst_5 : f32 to vector<16x4xf32>
    %11 = arith.divf %9, %10 : vector<16x4xf32>
    %cst_6 = arith.constant dense<0xFF800000> : vector<16xf32>
    %12 = vector.multi_reduction <maximumf>, %11, %cst_6 [1] : vector<16x4xf32> to vector<16xf32>
    %13 = vector.shape_cast %12 : vector<16xf32> to vector<16x1xf32>
    %14 = vector.broadcast %13 : vector<16x1xf32> to vector<16x4xf32>
    %15 = arith.subf %11, %14 : vector<16x4xf32>
    %16 = math.exp %15 : vector<16x4xf32>
    %cst_7 = arith.constant dense<0.000000e+00> : vector<16xf32>
    %17 = vector.multi_reduction <add>, %16, %cst_7 [1] : vector<16x4xf32> to vector<16xf32>
    %18 = vector.shape_cast %17 : vector<16xf32> to vector<16x1xf32>
    %19 = vector.broadcast %18 : vector<16x1xf32> to vector<16x4xf32>
    %20 = arith.divf %16, %19 : vector<16x4xf32>
    %21 = tpu.iota {dimensions = array<i32: 1>} : vector<16x4xi32>
    %cst_8 = arith.constant 0.000000e+00 : f32
    %22 = vector.broadcast %cst_8 : f32 to vector<16x4xf32>
    %cst_9 = arith.constant 1.000000e+30 : f32
    %23 = vector.broadcast %cst_9 : f32 to vector<16x4xf32>
    %24 = arith.mulf %22, %23 : vector<16x4xf32>
    %25 = arith.subf %20, %24 : vector<16x4xf32>
    %cst_10 = arith.constant dense<0xFF800000> : vector<16xf32>
    %26 = vector.multi_reduction <maximumf>, %25, %cst_10 [1] : vector<16x4xf32> to vector<16xf32>
    %27 = vector.shape_cast %26 : vector<16xf32> to vector<16x1xf32>
    %28 = vector.broadcast %27 : vector<16x1xf32> to vector<16x4xf32>
    %29 = arith.cmpf oeq, %25, %28 : vector<16x4xf32>
    %c4_i32 = arith.constant 4 : i32
    %30 = vector.broadcast %c4_i32 : i32 to vector<16x4xi32>
    %31 = arith.select %29, %21, %30 : vector<16x4xi1>, vector<16x4xi32>
    %cst_11 = arith.constant dense<2147483647> : vector<16xi32>
    %32 = vector.multi_reduction <minsi>, %31, %cst_11 [1] : vector<16x4xi32> to vector<16xi32>
    %33 = vector.shape_cast %32 : vector<16xi32> to vector<16x1xi32>
    %34 = vector.broadcast %33 : vector<16x1xi32> to vector<16x4xi32>
    %35 = arith.cmpi eq, %21, %34 : vector<16x4xi32>
    %36 = arith.extui %35 : vector<16x4xi1> to vector<16x4xi32>
    %37 = arith.sitofp %36 : vector<16x4xi32> to vector<16x4xf32>
    %38 = arith.addf %22, %37 : vector<16x4xf32>
    %cst_12 = arith.constant 1.000000e+30 : f32
    %39 = vector.broadcast %cst_12 : f32 to vector<16x4xf32>
    %40 = arith.mulf %38, %39 : vector<16x4xf32>
    %41 = arith.subf %20, %40 : vector<16x4xf32>
    %cst_13 = arith.constant dense<0xFF800000> : vector<16xf32>
    %42 = vector.multi_reduction <maximumf>, %41, %cst_13 [1] : vector<16x4xf32> to vector<16xf32>
    %43 = vector.shape_cast %42 : vector<16xf32> to vector<16x1xf32>
    %44 = vector.broadcast %43 : vector<16x1xf32> to vector<16x4xf32>
    %45 = arith.cmpf oeq, %41, %44 : vector<16x4xf32>
    %c4_i32_14 = arith.constant 4 : i32
    %46 = vector.broadcast %c4_i32_14 : i32 to vector<16x4xi32>
    %47 = arith.select %45, %21, %46 : vector<16x4xi1>, vector<16x4xi32>
    %cst_15 = arith.constant dense<2147483647> : vector<16xi32>
    %48 = vector.multi_reduction <minsi>, %47, %cst_15 [1] : vector<16x4xi32> to vector<16xi32>
    %49 = vector.shape_cast %48 : vector<16xi32> to vector<16x1xi32>
    %50 = vector.broadcast %49 : vector<16x1xi32> to vector<16x4xi32>
    %51 = arith.cmpi eq, %21, %50 : vector<16x4xi32>
    %52 = arith.extui %51 : vector<16x4xi1> to vector<16x4xi32>
    %53 = arith.sitofp %52 : vector<16x4xi32> to vector<16x4xf32>
    %54 = arith.addf %38, %53 : vector<16x4xf32>
    %55 = arith.mulf %20, %54 : vector<16x4xf32>
    %cst_16 = arith.constant dense<0.000000e+00> : vector<16xf32>
    %56 = vector.multi_reduction <add>, %55, %cst_16 [1] : vector<16x4xf32> to vector<16xf32>
    %57 = vector.shape_cast %56 : vector<16xf32> to vector<16x1xf32>
    %cst_17 = arith.constant 9.99999968E-21 : f32
    %58 = vector.broadcast %cst_17 : f32 to vector<16x1xf32>
    %59 = arith.addf %57, %58 : vector<16x1xf32>
    %60 = vector.broadcast %59 : vector<16x1xf32> to vector<16x4xf32>
    %61 = arith.divf %55, %60 : vector<16x4xf32>
    %cst_18 = arith.constant dense<0xFF800000> : vector<16xf32>
    %62 = vector.multi_reduction <maximumf>, %6, %cst_18 [1] : vector<16x2xf32> to vector<16xf32>
    %63 = vector.shape_cast %62 : vector<16xf32> to vector<16x1xf32>
    %64 = vector.broadcast %63 : vector<16x1xf32> to vector<16x2xf32>
    %65 = arith.subf %6, %64 : vector<16x2xf32>
    %66 = math.exp %65 : vector<16x2xf32>
    %cst_19 = arith.constant dense<0.000000e+00> : vector<16xf32>
    %67 = vector.multi_reduction <add>, %66, %cst_19 [1] : vector<16x2xf32> to vector<16xf32>
    %68 = vector.shape_cast %67 : vector<16xf32> to vector<16x1xf32>
    %69 = vector.broadcast %68 : vector<16x1xf32> to vector<16x2xf32>
    %70 = arith.divf %66, %69 : vector<16x2xf32>
    %71 = vector.extract_strided_slice %70 {offsets = [0, 0], sizes = [16, 1], strides = [1, 1]} : vector<16x2xf32> to vector<16x1xf32>
    %72 = vector.broadcast %71 : vector<16x1xf32> to vector<16x4xf32>
    %73 = arith.mulf %61, %72 : vector<16x4xf32>
    %c0_20 = arith.constant 0 : index
    %c0_21 = arith.constant 0 : index
    %74 = vector.load %arg5[%c0_20, %c0_21] : memref<4x256xf32, #tpu.memory_space<vmem>>, vector<4x256xf32>
    %cst_22 = arith.constant dense<0.000000e+00> : vector<16x256xf32>
    %75 = tpu.matmul %73, %74, %cst_22 {dimension_numbers = #tpu.dot_dimension_numbers<[1], [0], [0], [1], [0, 0, 1, 1], [], []>} : vector<16x4xf32>, vector<4x256xf32>, vector<16x256xf32> -> vector<16x256xf32>
    %76 = vector.extract_strided_slice %3 {offsets = [0, 0], sizes = [16, 256], strides = [1, 1]} : vector<16x512xf32> to vector<16x256xf32>
    %77 = vector.extract_strided_slice %3 {offsets = [0, 256], sizes = [16, 256], strides = [1, 1]} : vector<16x512xf32> to vector<16x256xf32>
    %cst_23 = arith.constant 0.000000e+00 : f32
    %78 = vector.broadcast %cst_23 : f32 to vector<16x256xf32>
    %79 = arith.maximumf %76, %78 : vector<16x256xf32>
    %80 = arith.mulf %79, %77 : vector<16x256xf32>
    %81 = arith.mulf %80, %75 : vector<16x256xf32>
    %82 = vector.extract_strided_slice %4 {offsets = [0, 0], sizes = [16, 128], strides = [1, 1]} : vector<16x256xf32> to vector<16x128xf32>
    %83 = vector.extract_strided_slice %4 {offsets = [0, 128], sizes = [16, 128], strides = [1, 1]} : vector<16x256xf32> to vector<16x128xf32>
    %cst_24 = arith.constant 0.000000e+00 : f32
    %84 = vector.broadcast %cst_24 : f32 to vector<16x128xf32>
    %85 = arith.maximumf %82, %84 : vector<16x128xf32>
    %86 = arith.mulf %85, %83 : vector<16x128xf32>
    %87 = vector.extract_strided_slice %70 {offsets = [0, 1], sizes = [16, 1], strides = [1, 1]} : vector<16x2xf32> to vector<16x1xf32>
    %88 = vector.broadcast %87 : vector<16x1xf32> to vector<16x128xf32>
    %89 = arith.mulf %86, %88 : vector<16x128xf32>
    %90 = tpu.concatenate %81, %89 in 1 : vector<16x256xf32>, vector<16x128xf32> -> vector<16x384xf32>
    %c0_25 = arith.constant 0 : index
    %c0_26 = arith.constant 0 : index
    %91 = vector.load %arg6[%c0_25, %c0_26] : memref<384x32xf32, #tpu.memory_space<vmem>>, vector<384x32xf32>
    %cst_27 = arith.constant dense<0.000000e+00> : vector<16x32xf32>
    %92 = tpu.matmul %90, %91, %cst_27 {dimension_numbers = #tpu.dot_dimension_numbers<[1], [0], [0], [1], [0, 0, 1, 1], [], []>} : vector<16x384xf32>, vector<384x32xf32>, vector<16x32xf32> -> vector<16x32xf32>
    %c0_28 = arith.constant 0 : index
    %c0_29 = arith.constant 0 : index
    %93 = vector.load %arg7[%c0_28, %c0_29] : memref<16x32xf32, #tpu.memory_space<vmem>>, vector<16x32xf32>
    tpu.vector_store %arg7[%c0_28, %c0_29], %92 {strides = array<i32>} : memref<16x32xf32, #tpu.memory_space<vmem>>, vector<16x32xf32>,
    return
  }
  func.func @transform_0(%arg0: i32) -> (i32, i32) {
    %c0_i32 = arith.constant 0 : i32
    %c0_i32_0 = arith.constant 0 : i32
    return %arg0, %c0_i32 : i32, i32
  }
  func.func @transform_1(%arg0: i32) -> (i32, i32) {
    %c0_i32 = arith.constant 0 : i32
    %c0_i32_0 = arith.constant 0 : i32
    %c0_i32_1 = arith.constant 0 : i32
    return %c0_i32, %c0_i32_0 : i32, i32
  }
  func.func @transform_2(%arg0: i32) -> (i32, i32) {
    %c0_i32 = arith.constant 0 : i32
    %c0_i32_0 = arith.constant 0 : i32
    %c0_i32_1 = arith.constant 0 : i32
    return %c0_i32, %c0_i32_0 : i32, i32
  }
  func.func @transform_3(%arg0: i32) -> (i32, i32) {
    %c0_i32 = arith.constant 0 : i32
    %c0_i32_0 = arith.constant 0 : i32
    %c0_i32_1 = arith.constant 0 : i32
    return %c0_i32, %c0_i32_0 : i32, i32
  }
  func.func @transform_4(%arg0: i32) -> (i32, i32) {
    %c0_i32 = arith.constant 0 : i32
    %c0_i32_0 = arith.constant 0 : i32
    %c0_i32_1 = arith.constant 0 : i32
    return %c0_i32, %c0_i32_0 : i32, i32
  }
  func.func @transform_5(%arg0: i32) -> (i32, i32) {
    %c0_i32 = arith.constant 0 : i32
    %c0_i32_0 = arith.constant 0 : i32
    %c0_i32_1 = arith.constant 0 : i32
    return %c0_i32, %c0_i32_0 : i32, i32
  }
  func.func @transform_6(%arg0: i32) -> (i32, i32) {
    %c0_i32 = arith.constant 0 : i32
    %c0_i32_0 = arith.constant 0 : i32
    return %arg0, %c0_i32 : i32, i32
  }
}

</mosaic_0001>

<llo_original>
// kernel: tpu_custom_call.1
$region0: #{tpu_custom_call.1}
  #allocation0 [shape = 'u32[]', space=smem, size = 0x4, offset = 0x4, fixed_abs, tag = 'smem constant byte address 0x4 - core index']
  #allocation1 [shape = 'u32[144,128]{1,0:T(1,128)}', space=vmem, size = 0x12000, scoped, tag = 'internal scratch']
  %s0 = inlined_call_operand.vmem [shape: f32[16,32], index: 0, kind: input, shape index: {}]
  %s1 = inlined_call_operand.vmem [shape: f32[1,4], index: 1, kind: input, shape index: {}]
  %s2 = inlined_call_operand.vmem [shape: f32[32,774], index: 2, kind: input, shape index: {}]
  %s3 = inlined_call_operand.vmem [shape: f32[32,6], index: 3, kind: input, shape index: {}]
  %s4 = inlined_call_operand.vmem [shape: f32[4,256], index: 4, kind: input, shape index: {}]
  %s5 = inlined_call_operand.vmem [shape: f32[384,32], index: 5, kind: input, shape index: {}]
  %s6 = inlined_call_operand.hbm [shape: f32[16,32], index: 6, kind: output, shape index: {}]
  %s7 = sld [smem:[#allocation0]]
  $region34: #{tpu_custom_call.1} parent=0
    _
  %s9 = ssub.s32 1, %s7
  %s10 = scalar_select 0, %s9, %s7
  $region1: #{tpu_custom_call.1} parent=0
    #allocation2 [shape = 'u8[8192]{0}', space=vmem, size = 0x2000, scoped, tag = 'output window, operand 0, single buffered']
    #allocation3 [shape = 's32[1]{0}', space=sflag, size = 0x4, scoped, tag = 'scoped memory for tpu_custom_call.1']
    %11 = vsyncpa [#allocation3], 0
    // Predicated region
    $region2: #{tpu_custom_call.1} parent=1 // pred_check
      _
    $region3: #{tpu_custom_call.1} parent=1 // pred_check_branch
      %13 = sbr.rel (0) target = $region5
    $region4: #{tpu_custom_call.1} parent=1 // pred_region
      _
    $region5: #{tpu_custom_call.1} parent=1 // pred_fallthru
      _
    // Predicated region
    $region6: #{tpu_custom_call.1} parent=1 // pred_check
      _
    $region7: #{tpu_custom_call.1} parent=1 // pred_check_branch
      %15 = sbr.rel (0) target = $region9
    $region8: #{tpu_custom_call.1} parent=1 // pred_region
      _
    $region9: #{tpu_custom_call.1} parent=1 // pred_fallthru
      _
    // Predicated region
    $region10: #{tpu_custom_call.1} parent=1 // pred_check
      _
    $region11: #{tpu_custom_call.1} parent=1 // pred_check_branch
      %17 = sbr.rel (0) target = $region13
    $region12: #{tpu_custom_call.1} parent=1 // pred_region
      _
    $region13: #{tpu_custom_call.1} parent=1 // pred_fallthru
      _
    // Predicated region
    $region14: #{tpu_custom_call.1} parent=1 // pred_check
      _
    $region15: #{tpu_custom_call.1} parent=1 // pred_check_branch
      %19 = sbr.rel (0) target = $region17
    $region16: #{tpu_custom_call.1} parent=1 // pred_region
      _
    $region17: #{tpu_custom_call.1} parent=1 // pred_fallthru
      _
    // Predicated region
    $region18: #{tpu_custom_call.1} parent=1 // pred_check
      _
    $region19: #{tpu_custom_call.1} parent=1 // pred_check_branch
      %21 = sbr.rel (0) target = $region21
    $region20: #{tpu_custom_call.1} parent=1 // pred_region
      _
    $region21: #{tpu_custom_call.1} parent=1 // pred_fallthru
      _
    // Predicated region
    $region22: #{tpu_custom_call.1} parent=1 // pred_check
      _
    $region23: #{tpu_custom_call.1} parent=1 // pred_check_branch
      %23 = sbr.rel (0) target = $region25
    $region24: #{tpu_custom_call.1} parent=1 // pred_region
      _
    $region25: #{tpu_custom_call.1} parent=1 // pred_fallthru
      _
    %v24 = vld [vmem:[%s0] sm:$0xff]
    %v25 = vld [vmem:[%s0 + $0x8] sm:$0xff]
    %v26 = vld [vmem:[%s2] sm:$0xff]
    %v27 = vld [vmem:[%s2 + $0x8] sm:$0xff]
    %v28 = vld [vmem:[%s2 + $0x10] sm:$0xff]
    %v29 = vld [vmem:[%s2 + $0x18] sm:$0xff]
    %v30 = vld [vmem:[%s2 + $0x20] sm:$0xff]
    %v31 = vld [vmem:[%s2 + $0x28] sm:$0xff]
    %v32 = vld [vmem:[%s2 + $0x30] sm:$0xff]
    %v33 = vld [vmem:[%s2 + $0x38] sm:$0xff]
    %v34 = vld [vmem:[%s2 + $0x40] sm:$0xff]
    %v35 = vld [vmem:[%s2 + $0x48] sm:$0xff]
    %v36 = vld [vmem:[%s2 + $0x50] sm:$0xff]
    %v37 = vld [vmem:[%s2 + $0x58] sm:$0xff]
    %v38 = vld [vmem:[%s2 + $0x60] sm:$0xff]
    %v39 = vld [vmem:[%s2 + $0x68] sm:$0xff]
    %v40 = vld [vmem:[%s2 + $0x70] sm:$0xff]
    %v41 = vld [vmem:[%s2 + $0x78] sm:$0xff]
    %v42 = vld [vmem:[%s2 + $0x80] sm:$0xff]
    %v43 = vld [vmem:[%s2 + $0x88] sm:$0xff]
    %v44 = vld [vmem:[%s2 + $0x90] sm:$0xff]
    %v45 = vld [vmem:[%s2 + $0x98] sm:$0xff]
    %v46 = vld [vmem:[%s2 + $0xa0] sm:$0xff]
    %v47 = vld [vmem:[%s2 + $0xa8] sm:$0xff]
    %v48 = vld [vmem:[%s2 + $0xb0] sm:$0xff]
    %v49 = vld [vmem:[%s2 + $0xb8] sm:$0xff]
    %v50 = vld [vmem:[%s2 + $0xc0] sm:$0xff]
    %v51 = vld [vmem:[%s2 + $0xc8] sm:$0xff]
    %v52 = vld [vmem:[%s2 + $0xd0] sm:$0xff]
    %v53 = vld [vmem:[%s2 + $0xd8] sm:$0xff]
    %vm54 = vcmask 261120
    %v56 = vsel %vm54, %v24, 0
    %v59 = vsel %vm54, %v25, 0
    %61 = vmatprep.subr.mxu0 0.0
    %62 = vmatpush1.msra.mxu0 0.0
    %63 = vmatprep.subr.mxu0 0.0
    %64 = vmatpush1.msra.mxu0 0.0
    %65 = vmatprep.subr.mxu0 0.0
    %66 = vmatpush1.msra.mxu0 0.0
    %67 = vmatprep.subr.mxu0 0.0
    %68 = vmatpush1.msra.mxu0 0.0
    %69 = vmatprep.subr.mxu0 0.0
    %70 = vmatpush1.msra.mxu0 0.0
    %71 = vmatprep.subr.mxu0 0.0
    %72 = vmatpush1.msra.mxu0 0.0
    %73 = vmatprep.subr.mxu0 0.0
    %74 = vmatpush1.msra.mxu0 0.0
    %75 = vmatprep.subr.mxu0 0.0
    %76 = vmatpush1.msra.mxu0 0.0
    %77 = vmatprep.subr.mxu0 0.0
    %78 = vmatpush1.msra.mxu0 0.0
    %79 = vmatprep.subr.mxu0 0.0
    %80 = vmatpush1.msra.mxu0 0.0
    %81 = vmatprep.subr.mxu0 0.0
    %82 = vmatpush1.msra.mxu0 0.0
    %83 = vmatprep.subr.mxu0 0.0
    %84 = vmatpush1.msra.mxu0 0.0
    %85 = vmatprep.subr.mxu0 %v48
    %86 = vmatpush1.msra.mxu0 %v47
    %87 = vmatprep.subr.mxu0 %v41
    %88 = vmatpush1.msra.mxu0 %v40
    %89 = vmatprep.subr.mxu0 %v34
    %90 = vmatpush1.msra.mxu0 %v33
    %91 = vmatprep.subr.mxu0 %v27
    %92 = vmatpush1.msra.mxu0 %v26
    %93 = vmatprep.subr.mxu0 0.0
    %94 = vmatpush2.msra.mxu0 0.0
    %95 = vmatprep.subr.mxu0 0.0
    %96 = vmatpush2.msra.mxu0 0.0
    %97 = vmatprep.subr.mxu0 0.0
    %98 = vmatpush2.msra.mxu0 0.0
    %99 = vmatprep.subr.mxu0 0.0
    %100 = vmatpush2.msra.mxu0 0.0
    %101 = vmatprep.subr.mxu0 0.0
    %102 = vmatpush2.msra.mxu0 0.0
    %103 = vmatprep.subr.mxu0 0.0
    %104 = vmatpush2.msra.mxu0 0.0
    %105 = vmatprep.subr.mxu0 0.0
    %106 = vmatpush2.msra.mxu0 0.0
    %107 = vmatprep.subr.mxu0 0.0
    %108 = vmatpush2.msra.mxu0 0.0
    %109 = vmatprep.subr.mxu0 0.0
    %110 = vmatpush2.msra.mxu0 0.0
    %111 = vmatprep.subr.mxu0 0.0
    %112 = vmatpush2.msra.mxu0 0.0
    %113 = vmatprep.subr.mxu0 0.0
    %114 = vmatpush2.msra.mxu0 0.0
    %115 = vmatprep.subr.mxu0 0.0
    %116 = vmatpush2.msra.mxu0 0.0
    %117 = vmatprep.subr.mxu0 0.0
    %118 = vmatpush2.msra.mxu0 0.0
    %119 = vmatprep.subr.mxu0 0.0
    %120 = vmatpush2.msra.mxu0 0.0
    %121 = vmatprep.subr.mxu0 0.0
    %122 = vmatpush2.msra.mxu0 0.0
    %123 = vmatprep.subr.mxu0 0.0
    %124 = vmatpush2.msra.mxu0 0.0
    %125 = vmatprep.mubr.f32.mxu0 0.0
    %126 = vmatmul.mubr.f32.gmra.mxu0 %v56
    %v127 = vpop.f32.mrf.mxu0
    %v128 = vadd.f32 0.0, %v127
    %v129 = vpop.f32.mrf.mxu0
    %v130 = vadd.f32 0.0, %v129
    %131 = vmatprep.mubr.f32.mxu0 0.0
    %132 = vmatmul.mubr.f32.gmra.mxu0 %v59
    %v133 = vpop.f32.mrf.mxu0
    %v134 = vadd.f32 0.0, %v133
    %v135 = vpop.f32.mrf.mxu0
    %v136 = vadd.f32 0.0, %v135
    %137 = vdwg.mxu0
    %138 = vmatprep.subr.mxu0 0.0
    %139 = vmatpush1.msra.mxu0 0.0
    %140 = vmatprep.subr.mxu0 0.0
    %141 = vmatpush1.msra.mxu0 0.0
    %142 = vmatprep.subr.mxu0 0.0
    %143 = vmatpush1.msra.mxu0 0.0
    %144 = vmatprep.subr.mxu0 0.0
    %145 = vmatpush1.msra.mxu0 0.0
    %146 = vmatprep.subr.mxu0 0.0
    %147 = vmatpush1.msra.mxu0 0.0
    %148 = vmatprep.subr.mxu0 0.0
    %149 = vmatpush1.msra.mxu0 0.0
    %150 = vmatprep.subr.mxu0 0.0
    %151 = vmatpush1.msra.mxu0 0.0
    %152 = vmatprep.subr.mxu0 0.0
    %153 = vmatpush1.msra.mxu0 0.0
    %154 = vmatprep.subr.mxu0 0.0
    %155 = vmatpush1.msra.mxu0 0.0
    %156 = vmatprep.subr.mxu0 0.0
    %157 = vmatpush1.msra.mxu0 0.0
    %158 = vmatprep.subr.mxu0 0.0
    %159 = vmatpush1.msra.mxu0 0.0
    %160 = vmatprep.subr.mxu0 0.0
    %161 = vmatpush1.msra.mxu0 0.0
    %162 = vmatprep.subr.mxu0 %v50
    %163 = vmatpush1.msra.mxu0 %v49
    %164 = vmatprep.subr.mxu0 %v43
    %165 = vmatpush1.msra.mxu0 %v42
    %166 = vmatprep.subr.mxu0 %v36
    %167 = vmatpush1.msra.mxu0 %v35
    %168 = vmatprep.subr.mxu0 %v29
    %169 = vmatpush1.msra.mxu0 %v28
    %170 = vmatprep.subr.mxu0 0.0
    %171 = vmatpush2.msra.mxu0 0.0
    %172 = vmatprep.subr.mxu0 0.0
    %173 = vmatpush2.msra.mxu0 0.0
    %174 = vmatprep.subr.mxu0 0.0
    %175 = vmatpush2.msra.mxu0 0.0
    %176 = vmatprep.subr.mxu0 0.0
    %177 = vmatpush2.msra.mxu0 0.0
    %178 = vmatprep.subr.mxu0 0.0
    %179 = vmatpush2.msra.mxu0 0.0
    %180 = vmatprep.subr.mxu0 0.0
    %181 = vmatpush2.msra.mxu0 0.0
    %182 = vmatprep.subr.mxu0 0.0
    %183 = vmatpush2.msra.mxu0 0.0
    %184 = vmatprep.subr.mxu0 0.0
    %185 = vmatpush2.msra.mxu0 0.0
    %186 = vmatprep.subr.mxu0 0.0
    %187 = vmatpush2.msra.mxu0 0.0
    %188 = vmatprep.subr.mxu0 0.0
    %189 = vmatpush2.msra.mxu0 0.0
    %190 = vmatprep.subr.mxu0 0.0
    %191 = vmatpush2.msra.mxu0 0.0
    %192 = vmatprep.subr.mxu0 0.0
    %193 = vmatpush2.msra.mxu0 0.0
    %194 = vmatprep.subr.mxu0 0.0
    %195 = vmatpush2.msra.mxu0 0.0
    %196 = vmatprep.subr.mxu0 0.0
    %197 = vmatpush2.msra.mxu0 0.0
    %198 = vmatprep.subr.mxu0 0.0
    %199 = vmatpush2.msra.mxu0 0.0
    %200 = vmatprep.subr.mxu0 0.0
    %201 = vmatpush2.msra.mxu0 0.0
    %202 = vmatprep.mubr.f32.mxu0 0.0
    %203 = vmatmul.mubr.f32.gmra.mxu0 %v56
    %v204 = vpop.f32.mrf.mxu0
    %v205 = vadd.f32 0.0, %v204
    %v206 = vpop.f32.mrf.mxu0
    %v207 = vadd.f32 0.0, %v206
    %208 = vmatprep.mubr.f32.mxu0 0.0
    %209 = vmatmul.mubr.f32.gmra.mxu0 %v59
    %v210 = vpop.f32.mrf.mxu0
    %v211 = vadd.f32 0.0, %v210
    %v212 = vpop.f32.mrf.mxu0
    %v213 = vadd.f32 0.0, %v212
    %214 = vdwg.mxu0
    %215 = vmatprep.subr.mxu0 0.0
    %216 = vmatpush1.msra.mxu0 0.0
    %217 = vmatprep.subr.mxu0 0.0
    %218 = vmatpush1.msra.mxu0 0.0
    %219 = vmatprep.subr.mxu0 0.0
    %220 = vmatpush1.msra.mxu0 0.0
    %221 = vmatprep.subr.mxu0 0.0
    %222 = vmatpush1.msra.mxu0 0.0
    %223 = vmatprep.subr.mxu0 0.0
    %224 = vmatpush1.msra.mxu0 0.0
    %225 = vmatprep.subr.mxu0 0.0
    %226 = vmatpush1.msra.mxu0 0.0
    %227 = vmatprep.subr.mxu0 0.0
    %228 = vmatpush1.msra.mxu0 0.0
    %229 = vmatprep.subr.mxu0 0.0
    %230 = vmatpush1.msra.mxu0 0.0
    %231 = vmatprep.subr.mxu0 0.0
    %232 = vmatpush1.msra.mxu0 0.0
    %233 = vmatprep.subr.mxu0 0.0
    %234 = vmatpush1.msra.mxu0 0.0
    %235 = vmatprep.subr.mxu0 0.0
    %236 = vmatpush1.msra.mxu0 0.0
    %237 = vmatprep.subr.mxu0 0.0
    %238 = vmatpush1.msra.mxu0 0.0
    %239 = vmatprep.subr.mxu0 %v52
    %240 = vmatpush1.msra.mxu0 %v51
    %241 = vmatprep.subr.mxu0 %v45
    %242 = vmatpush1.msra.mxu0 %v44
    %243 = vmatprep.subr.mxu0 %v38
    %244 = vmatpush1.msra.mxu0 %v37
    %245 = vmatprep.subr.mxu0 %v31
    %246 = vmatpush1.msra.mxu0 %v30
    %247 = vmatprep.subr.mxu0 0.0
    %248 = vmatpush2.msra.mxu0 0.0
    %249 = vmatprep.subr.mxu0 0.0
    %250 = vmatpush2.msra.mxu0 0.0
    %251 = vmatprep.subr.mxu0 0.0
    %252 = vmatpush2.msra.mxu0 0.0
    %253 = vmatprep.subr.mxu0 0.0
    %254 = vmatpush2.msra.mxu0 0.0
    %255 = vmatprep.subr.mxu0 0.0
    %256 = vmatpush2.msra.mxu0 0.0
    %257 = vmatprep.subr.mxu0 0.0
    %258 = vmatpush2.msra.mxu0 0.0
    %259 = vmatprep.subr.mxu0 0.0
    %260 = vmatpush2.msra.mxu0 0.0
    %261 = vmatprep.subr.mxu0 0.0
    %262 = vmatpush2.msra.mxu0 0.0
    %263 = vmatprep.subr.mxu0 0.0
    %264 = vmatpush2.msra.mxu0 0.0
    %265 = vmatprep.subr.mxu0 0.0
    %266 = vmatpush2.msra.mxu0 0.0
    %267 = vmatprep.subr.mxu0 0.0
    %268 = vmatpush2.msra.mxu0 0.0
    %269 = vmatprep.subr.mxu0 0.0
    %270 = vmatpush2.msra.mxu0 0.0
    %271 = vmatprep.subr.mxu0 0.0
    %272 = vmatpush2.msra.mxu0 0.0
    %273 = vmatprep.subr.mxu0 0.0
    %274 = vmatpush2.msra.mxu0 0.0
    %275 = vmatprep.subr.mxu0 0.0
    %276 = vmatpush2.msra.mxu0 0.0
    %277 = vmatprep.subr.mxu0 0.0
    %278 = vmatpush2.msra.mxu0 0.0
    %279 = vmatprep.mubr.f32.mxu0 0.0
    %280 = vmatmul.mubr.f32.gmra.mxu0 %v56
    %v281 = vpop.f32.mrf.mxu0
    %v282 = vadd.f32 0.0, %v281
    %v283 = vpop.f32.mrf.mxu0
    %v284 = vadd.f32 0.0, %v283
    %285 = vmatprep.mubr.f32.mxu0 0.0
    %286 = vmatmul.mubr.f32.gmra.mxu0 %v59
    %v287 = vpop.f32.mrf.mxu0
    %v288 = vadd.f32 0.0, %v287
    %v289 = vpop.f32.mrf.mxu0
    %v290 = vadd.f32 0.0, %v289
    %291 = vdwg.mxu0
    %292 = vmatprep.subr.mxu0 0.0
    %293 = vmatpush1.msra.mxu0 0.0
    %294 = vmatprep.subr.mxu0 0.0
    %295 = vmatpush1.msra.mxu0 0.0
    %296 = vmatprep.subr.mxu0 0.0
    %297 = vmatpush1.msra.mxu0 0.0
    %298 = vmatprep.subr.mxu0 0.0
    %299 = vmatpush1.msra.mxu0 0.0
    %300 = vmatprep.subr.mxu0 0.0
    %301 = vmatpush1.msra.mxu0 0.0
    %302 = vmatprep.subr.mxu0 0.0
    %303 = vmatpush1.msra.mxu0 0.0
    %304 = vmatprep.subr.mxu0 0.0
    %305 = vmatpush1.msra.mxu0 0.0
    %306 = vmatprep.subr.mxu0 0.0
    %307 = vmatpush1.msra.mxu0 0.0
    %308 = vmatprep.subr.mxu0 0.0
    %309 = vmatpush1.msra.mxu0 0.0
    %310 = vmatprep.subr.mxu0 0.0
    %311 = vmatpush1.msra.mxu0 0.0
    %312 = vmatprep.subr.mxu0 0.0
    %313 = vmatpush1.msra.mxu0 0.0
    %314 = vmatprep.subr.mxu0 0.0
    %315 = vmatpush1.msra.mxu0 0.0
    %316 = vmatprep.subr.mxu0 0.0
    %317 = vmatpush1.msra.mxu0 %v53
    %318 = vmatprep.subr.mxu0 0.0
    %319 = vmatpush1.msra.mxu0 %v46
    %320 = vmatprep.subr.mxu0 0.0
    %321 = vmatpush1.msra.mxu0 %v39
    %322 = vmatprep.subr.mxu0 0.0
    %323 = vmatpush1.msra.mxu0 %v32
    %324 = vmatprep.subr.mxu0 0.0
    %325 = vmatpush2.msra.mxu0 0.0
    %326 = vmatprep.subr.mxu0 0.0
    %327 = vmatpush2.msra.mxu0 0.0
    %328 = vmatprep.subr.mxu0 0.0
    %329 = vmatpush2.msra.mxu0 0.0
    %330 = vmatprep.subr.mxu0 0.0
    %331 = vmatpush2.msra.mxu0 0.0
    %332 = vmatprep.subr.mxu0 0.0
    %333 = vmatpush2.msra.mxu0 0.0
    %334 = vmatprep.subr.mxu0 0.0
    %335 = vmatpush2.msra.mxu0 0.0
    %336 = vmatprep.subr.mxu0 0.0
    %337 = vmatpush2.msra.mxu0 0.0
    %338 = vmatprep.subr.mxu0 0.0
    %339 = vmatpush2.msra.mxu0 0.0
    %340 = vmatprep.subr.mxu0 0.0
    %341 = vmatpush2.msra.mxu0 0.0
    %342 = vmatprep.subr.mxu0 0.0
    %343 = vmatpush2.msra.mxu0 0.0
    %344 = vmatprep.subr.mxu0 0.0
    %345 = vmatpush2.msra.mxu0 0.0
    %346 = vmatprep.subr.mxu0 0.0
    %347 = vmatpush2.msra.mxu0 0.0
    %348 = vmatprep.subr.mxu0 0.0
    %349 = vmatpush2.msra.mxu0 0.0
    %350 = vmatprep.subr.mxu0 0.0
    %351 = vmatpush2.msra.mxu0 0.0
    %352 = vmatprep.subr.mxu0 0.0
    %353 = vmatpush2.msra.mxu0 0.0
    %354 = vmatprep.subr.mxu0 0.0
    %355 = vmatpush2.msra.mxu0 0.0
    %356 = vmatprep.mubr.f32.mxu0 0.0
    %357 = vmatmul.mubr.f32.gmra.mxu0 %v56
    %v358 = vpop.f32.mrf.mxu0
    %v359 = vadd.f32 0.0, %v358
    %v360 = vpop.f32.mrf.mxu0
    %361 = vmatprep.mubr.f32.mxu0 0.0
    %362 = vmatmul.mubr.f32.gmra.mxu0 %v59
    %v363 = vpop.f32.mrf.mxu0
    %v364 = vadd.f32 0.0, %v363
    %v365 = vpop.f32.mrf.mxu0
    %366 = vdwg.mxu0
    %v367 = vld [vmem:[%s1] sm:$0x1]
    %v369 = vlaneseq
    %v370 = vshrl.u32 %v369, 7
    %v371 = vsub.s32 0, %v370
    %v372 = vrot.slane %v367, %v371
    %v374 = vadd.f32 %v359, %v372
    %v375 = vadd.f32 %v364, %v372
    %vm376 = vcmask 31744
    %v377 = vsel %vm376, %v374, -inf
    %378 = vmax.xlane.f32.xlu0 %v377
    %v379 = vpop.xlane.xlu0 %378
    %v380 = vsel %vm376, %v375, -inf
    %381 = vmax.xlane.f32.xlu0 %v380
    %v382 = vpop.xlane.xlu0 %381
    %v383 = vsub.f32 %v374, %v379
    %v384 = vsub.f32 %v375, %v382
    %v385 = vmul.f32 %v383, 1.442695
    %v386 = vpow.pop %v385
    %v387 = vmul.f32 %v384, 1.442695
    %v388 = vpow.pop %v387
    %v389 = vsel %vm376, %v386, 0.0
    %390 = vadd.xlane.f32.xlu0 %v389
    %v391 = vpop.xlane.xlu0 %390
    %v392 = vsel %vm376, %v388, 0.0
    %393 = vadd.xlane.f32.xlu0 %v392
    %v394 = vpop.xlane.xlu0 %393
    %v395 = vrcp.pop %v391
    %v396 = vmul.f32 %v386, %v395
    %v397 = vrcp.pop %v394
    %v398 = vmul.f32 %v388, %v397
    %v399 = vlaneseq
    %v400 = vand.u32 %v399, 127
    %v401 = vsel %vm376, %v396, -inf
    %402 = vmax.xlane.f32.xlu0 %v401
    %v403 = vpop.xlane.xlu0 %402
    %v404 = vsel %vm376, %v398, -inf
    %405 = vmax.xlane.f32.xlu0 %v404
    %v406 = vpop.xlane.xlu0 %405
    %vm407 = vcmp.eq.f32.partialorder %v396, %v403
    %vm408 = vcmp.eq.f32.partialorder %v398, %v406
    %v409 = vsel %vm407, %v400, 4
    %v410 = vsel %vm408, %v400, 4
    %v411 = vsel %vm376, %v409, 2147483647
    %v412 = vand.u32 %v411, 65535
    %v413 = vshra.s32 %v411, 16
    %v414 = vcvt.s32.f32 %v412
    %v415 = vcvt.s32.f32 %v413
    %416 = vmin.xlane.f32.xlu0 %v415
    %v417 = vpop.xlane.xlu0 %416
    %vm418 = vcmp.eq.f32.partialorder %v415, %v417
    %v419 = vsel %vm418, %v414, inf
    %420 = vmin.xlane.f32.xlu0 %v419
    %v421 = vpop.xlane.xlu0 %420
    %v422 = vcvt.f32.s32 %v421
    %v423 = vcvt.f32.s32 %v417
    %v424 = vshll.u32 %v423, 16
    %v425 = vadd.s32 %v424, %v422
    %v426 = vsel %vm376, %v410, 2147483647
    %v427 = vand.u32 %v426, 65535
    %v428 = vshra.s32 %v426, 16
    %v429 = vcvt.s32.f32 %v427
    %v430 = vcvt.s32.f32 %v428
    %431 = vmin.xlane.f32.xlu0 %v430
    %v432 = vpop.xlane.xlu0 %431
    %vm433 = vcmp.eq.f32.partialorder %v430, %v432
    %v434 = vsel %vm433, %v429, inf
    %435 = vmin.xlane.f32.xlu0 %v434
    %v436 = vpop.xlane.xlu0 %435
    %v437 = vcvt.f32.s32 %v436
    %v438 = vcvt.f32.s32 %v432
    %v439 = vshll.u32 %v438, 16
    %v440 = vadd.s32 %v439, %v437
    %vm441 = vcmp.eq.s32.totalorder %v400, %v425
    %vm442 = vcmp.eq.s32.totalorder %v400, %v440
    %v443 = vsel %vm441, 1, 0
    %v444 = vsel %vm442, 1, 0
    %v445 = vcvt.s32.f32 %v443
    %v446 = vcvt.s32.f32 %v444
    %v447 = vadd.f32 %v445, 0.0
    %v448 = vadd.f32 %v446, 0.0
    %v449 = vmul.f32 %v447, 1e+30
    %v450 = vmul.f32 %v448, 1e+30
    %v451 = vsub.f32 %v396, %v449
    %v452 = vsub.f32 %v398, %v450
    %v453 = vsel %vm376, %v451, -inf
    %454 = vmax.xlane.f32.xlu0 %v453
    %v455 = vpop.xlane.xlu0 %454
    %v456 = vsel %vm376, %v452, -inf
    %457 = vmax.xlane.f32.xlu0 %v456
    %v458 = vpop.xlane.xlu0 %457
    %vm459 = vcmp.eq.f32.partialorder %v451, %v455
    %vm460 = vcmp.eq.f32.partialorder %v452, %v458
    %v461 = vsel %vm459, %v400, 4
    %v462 = vsel %vm460, %v400, 4
    %v463 = vsel %vm376, %v461, 2147483647
    %v464 = vand.u32 %v463, 65535
    %v465 = vshra.s32 %v463, 16
    %v466 = vcvt.s32.f32 %v464
    %v467 = vcvt.s32.f32 %v465
    %468 = vmin.xlane.f32.xlu0 %v467
    %v469 = vpop.xlane.xlu0 %468
    %vm470 = vcmp.eq.f32.partialorder %v467, %v469
    %v471 = vsel %vm470, %v466, inf
    %472 = vmin.xlane.f32.xlu0 %v471
    %v473 = vpop.xlane.xlu0 %472
    %v474 = vcvt.f32.s32 %v473
    %v475 = vcvt.f32.s32 %v469
    %v476 = vshll.u32 %v475, 16
    %v477 = vadd.s32 %v476, %v474
    %v478 = vsel %vm376, %v462, 2147483647
    %v479 = vand.u32 %v478, 65535
    %v480 = vshra.s32 %v478, 16
    %v481 = vcvt.s32.f32 %v479
    %v482 = vcvt.s32.f32 %v480
    %483 = vmin.xlane.f32.xlu0 %v482
    %v484 = vpop.xlane.xlu0 %483
    %vm485 = vcmp.eq.f32.partialorder %v482, %v484
    %v486 = vsel %vm485, %v481, inf
    %487 = vmin.xlane.f32.xlu0 %v486
    %v488 = vpop.xlane.xlu0 %487
    %v489 = vcvt.f32.s32 %v488
    %v490 = vcvt.f32.s32 %v484
    %v491 = vshll.u32 %v490, 16
    %v492 = vadd.s32 %v491, %v489
    %vm493 = vcmp.eq.s32.totalorder %v400, %v477
    %vm494 = vcmp.eq.s32.totalorder %v400, %v492
    %v495 = vsel %vm493, 1, 0
    %v496 = vsel %vm494, 1, 0
    %v497 = vcvt.s32.f32 %v495
    %v498 = vcvt.s32.f32 %v496
    %v499 = vadd.f32 %v447, %v497
    %v500 = vadd.f32 %v448, %v498
    %v501 = vmul.f32 %v396, %v499
    %v502 = vmul.f32 %v398, %v500
    %v503 = vsel %vm376, %v501, 0.0
    %504 = vadd.xlane.f32.xlu0 %v503
    %v505 = vpop.xlane.xlu0 %504
    %v506 = vsel %vm376, %v502, 0.0
    %507 = vadd.xlane.f32.xlu0 %v506
    %v508 = vpop.xlane.xlu0 %507
    %v509 = vadd.f32 %v505, 1e-20
    %v510 = vadd.f32 %v508, 1e-20
    %v511 = vrcp.pop %v509
    %v512 = vmul.f32 %v501, %v511
    %v513 = vrcp.pop %v510
    %v514 = vmul.f32 %v502, %v513
    %vm515 = vcmask 48160
    %v516 = vsel %vm515, %v359, -inf
    %517 = vmax.xlane.f32.xlu0 %v516
    %v518 = vpop.xlane.xlu0 %517
    %v519 = vsel %vm515, %v364, -inf
    %520 = vmax.xlane.f32.xlu0 %v519
    %v521 = vpop.xlane.xlu0 %520
    %v522 = vsub.f32 %v359, %v518
    %v523 = vsub.f32 %v364, %v521
    %v524 = vmul.f32 %v522, 1.442695
    %v525 = vpow.pop %v524
    %v526 = vmul.f32 %v523, 1.442695
    %v527 = vpow.pop %v526
    %530 = vrot.lane.b32.xlu0 %v525, 124
    %v531 = vpop.permute.xlu0 %530
    %532 = vrot.lane.b32.xlu0 %v527, 124
    %v533 = vpop.permute.xlu0 %532
    %vm536 = vcmask 15360
    %v537 = vsel %vm536, %v531, 0.0
    %538 = vadd.xlane.f32.xlu0 %v537
    %v539 = vpop.xlane.xlu0 %538
    %v540 = vsel %vm536, %v533, 0.0
    %541 = vadd.xlane.f32.xlu0 %v540
    %v542 = vpop.xlane.xlu0 %541
    %v543 = vrcp.pop %v539
    %v544 = vmul.f32 %v525, %v543
    %v545 = vrcp.pop %v542
    %v546 = vmul.f32 %v527, %v545
    %548 = vset.pattern.permute.xlu0 4
    %549 = vperm.xlu0 %548, %v544
    %v550 = vpop.permute.xlu0 %549
    %553 = vset.pattern.permute.xlu0 4
    %554 = vperm.xlu0 %553, %v546
    %v555 = vpop.permute.xlu0 %554
    %v557 = vmul.f32 %v512, %v550
    %v558 = vmul.f32 %v514, %v555
    %v559 = vld [vmem:[%s4] sm:$0xff]
    %v561 = vcombine.high %v559, %v559
    %v563 = vsel %vm376, %v557, 0
    %v566 = vsel %vm376, %v558, 0
    %vm568 = vcmask 1043456
    %v569 = vsel %vm568, %v559, 0
    %v571 = vsel %vm568, %v561, 0
    %573 = vmatprep.subr.mxu0 0.0
    %574 = vmatpush1.msra.mxu0 0.0
    %575 = vmatprep.subr.mxu0 0.0
    %576 = vmatpush1.msra.mxu0 0.0
    %577 = vmatprep.subr.mxu0 0.0
    %578 = vmatpush1.msra.mxu0 0.0
    %579 = vmatprep.subr.mxu0 0.0
    %580 = vmatpush1.msra.mxu0 0.0
    %581 = vmatprep.subr.mxu0 0.0
    %582 = vmatpush1.msra.mxu0 0.0
    %583 = vmatprep.subr.mxu0 0.0
    %584 = vmatpush1.msra.mxu0 0.0
    %585 = vmatprep.subr.mxu0 0.0
    %586 = vmatpush1.msra.mxu0 0.0
    %587 = vmatprep.subr.mxu0 0.0
    %588 = vmatpush1.msra.mxu0 0.0
    %589 = vmatprep.subr.mxu0 0.0
    %590 = vmatpush1.msra.mxu0 0.0
    %591 = vmatprep.subr.mxu0 0.0
    %592 = vmatpush1.msra.mxu0 0.0
    %593 = vmatprep.subr.mxu0 0.0
    %594 = vmatpush1.msra.mxu0 0.0
    %595 = vmatprep.subr.mxu0 0.0
    %596 = vmatpush1.msra.mxu0 0.0
    %597 = vmatprep.subr.mxu0 0.0
    %598 = vmatpush1.msra.mxu0 0.0
    %599 = vmatprep.subr.mxu0 0.0
    %600 = vmatpush1.msra.mxu0 0.0
    %601 = vmatprep.subr.mxu0 0.0
    %602 = vmatpush1.msra.mxu0 0.0
    %603 = vmatprep.subr.mxu0 %v571
    %604 = vmatpush1.msra.mxu0 %v569
    %605 = vmatprep.subr.mxu0 0.0
    %606 = vmatpush2.msra.mxu0 0.0
    %607 = vmatprep.subr.mxu0 0.0
    %608 = vmatpush2.msra.mxu0 0.0
    %609 = vmatprep.subr.mxu0 0.0
    %610 = vmatpush2.msra.mxu0 0.0
    %611 = vmatprep.subr.mxu0 0.0
    %612 = vmatpush2.msra.mxu0 0.0
    %613 = vmatprep.subr.mxu0 0.0
    %614 = vmatpush2.msra.mxu0 0.0
    %615 = vmatprep.subr.mxu0 0.0
    %616 = vmatpush2.msra.mxu0 0.0
    %617 = vmatprep.subr.mxu0 0.0
    %618 = vmatpush2.msra.mxu0 0.0
    %619 = vmatprep.subr.mxu0 0.0
    %620 = vmatpush2.msra.mxu0 0.0
    %621 = vmatprep.subr.mxu0 0.0
    %622 = vmatpush2.msra.mxu0 0.0
    %623 = vmatprep.subr.mxu0 0.0
    %624 = vmatpush2.msra.mxu0 0.0
    %625 = vmatprep.subr.mxu0 0.0
    %626 = vmatpush2.msra.mxu0 0.0
    %627 = vmatprep.subr.mxu0 0.0
    %628 = vmatpush2.msra.mxu0 0.0
    %629 = vmatprep.subr.mxu0 0.0
    %630 = vmatpush2.msra.mxu0 0.0
    %631 = vmatprep.subr.mxu0 0.0
    %632 = vmatpush2.msra.mxu0 0.0
    %633 = vmatprep.subr.mxu0 0.0
    %634 = vmatpush2.msra.mxu0 0.0
    %635 = vmatprep.subr.mxu0 0.0
    %636 = vmatpush2.msra.mxu0 0.0
    %637 = vmatprep.mubr.f32.mxu0 0.0
    %638 = vmatmul.mubr.f32.gmra.mxu0 %v563
    %v639 = vpop.f32.mrf.mxu0
    %v640 = vadd.f32 0.0, %v639
    %v641 = vpop.f32.mrf.mxu0
    %v642 = vadd.f32 0.0, %v641
    %643 = vmatprep.mubr.f32.mxu0 0.0
    %644 = vmatmul.mubr.f32.gmra.mxu0 %v566
    %v645 = vpop.f32.mrf.mxu0
    %v646 = vadd.f32 0.0, %v645
    %v647 = vpop.f32.mrf.mxu0
    %v648 = vadd.f32 0.0, %v647
    %649 = vdwg.mxu0
    %v650 = vmax.f32 %v128, 0.0
    %v651 = vmax.f32 %v130, 0.0
    %v652 = vmax.f32 %v134, 0.0
    %v653 = vmax.f32 %v136, 0.0
    %v654 = vmul.f32 %v650, %v205
    %v655 = vmul.f32 %v651, %v207
    %v656 = vmul.f32 %v652, %v211
    %v657 = vmul.f32 %v653, %v213
    %v658 = vmul.f32 %v654, %v640
    %v659 = vmul.f32 %v655, %v642
    %v660 = vmul.f32 %v656, %v646
    %v661 = vmul.f32 %v657, %v648
    %v662 = vmax.f32 %v282, 0.0
    %v663 = vmax.f32 %v288, 0.0
    %v664 = vmul.f32 %v662, %v284
    %v665 = vmul.f32 %v663, %v290
    %666 = vset.pattern.permute.xlu0 5
    %667 = vperm.xlu0 %666, %v544
    %v668 = vpop.permute.xlu0 %667
    %670 = vset.pattern.permute.xlu0 5
    %671 = vperm.xlu0 %670, %v546
    %v672 = vpop.permute.xlu0 %671
    %v674 = vmul.f32 %v664, %v668
    %v675 = vmul.f32 %v665, %v672
    %v676 = vld [vmem:[%s5] sm:$0xff]
    %v677 = vld [vmem:[%s5 + $0x8] sm:$0xff]
    %v678 = vld [vmem:[%s5 + $0x10] sm:$0xff]
    %v679 = vld [vmem:[%s5 + $0x18] sm:$0xff]
    %v680 = vld [vmem:[%s5 + $0x20] sm:$0xff]
    %v681 = vld [vmem:[%s5 + $0x28] sm:$0xff]
    %v682 = vld [vmem:[%s5 + $0x30] sm:$0xff]
    %v683 = vld [vmem:[%s5 + $0x38] sm:$0xff]
    %v684 = vld [vmem:[%s5 + $0x40] sm:$0xff]
    %v685 = vld [vmem:[%s5 + $0x48] sm:$0xff]
    %v686 = vld [vmem:[%s5 + $0x50] sm:$0xff]
    %v687 = vld [vmem:[%s5 + $0x58] sm:$0xff]
    %v688 = vld [vmem:[%s5 + $0x60] sm:$0xff]
    %v689 = vld [vmem:[%s5 + $0x68] sm:$0xff]
    %v690 = vld [vmem:[%s5 + $0x70] sm:$0xff]
    %v691 = vld [vmem:[%s5 + $0x78] sm:$0xff]
    %v692 = vld [vmem:[%s5 + $0x80] sm:$0xff]
    %v693 = vld [vmem:[%s5 + $0x88] sm:$0xff]
    %v694 = vld [vmem:[%s5 + $0x90] sm:$0xff]
    %v695 = vld [vmem:[%s5 + $0x98] sm:$0xff]
    %v696 = vld [vmem:[%s5 + $0xa0] sm:$0xff]
    %v697 = vld [vmem:[%s5 + $0xa8] sm:$0xff]
    %v698 = vld [vmem:[%s5 + $0xb0] sm:$0xff]
    %v699 = vld [vmem:[%s5 + $0xb8] sm:$0xff]
    %v700 = vld [vmem:[%s5 + $0xc0] sm:$0xff]
    %v701 = vld [vmem:[%s5 + $0xc8] sm:$0xff]
    %v702 = vld [vmem:[%s5 + $0xd0] sm:$0xff]
    %v703 = vld [vmem:[%s5 + $0xd8] sm:$0xff]
    %v704 = vld [vmem:[%s5 + $0xe0] sm:$0xff]
    %v705 = vld [vmem:[%s5 + $0xe8] sm:$0xff]
    %v706 = vld [vmem:[%s5 + $0xf0] sm:$0xff]
    %v707 = vld [vmem:[%s5 + $0xf8] sm:$0xff]
    %v708 = vld [vmem:[%s5 + $0x100] sm:$0xff]
    %v709 = vld [vmem:[%s5 + $0x108] sm:$0xff]
    %v710 = vld [vmem:[%s5 + $0x110] sm:$0xff]
    %v711 = vld [vmem:[%s5 + $0x118] sm:$0xff]
    %v712 = vld [vmem:[%s5 + $0x120] sm:$0xff]
    %v713 = vld [vmem:[%s5 + $0x128] sm:$0xff]
    %v714 = vld [vmem:[%s5 + $0x130] sm:$0xff]
    %v715 = vld [vmem:[%s5 + $0x138] sm:$0xff]
    %v716 = vld [vmem:[%s5 + $0x140] sm:$0xff]
    %v717 = vld [vmem:[%s5 + $0x148] sm:$0xff]
    %v718 = vld [vmem:[%s5 + $0x150] sm:$0xff]
    %v719 = vld [vmem:[%s5 + $0x158] sm:$0xff]
    %v720 = vld [vmem:[%s5 + $0x160] sm:$0xff]
    %v721 = vld [vmem:[%s5 + $0x168] sm:$0xff]
    %v722 = vld [vmem:[%s5 + $0x170] sm:$0xff]
    %v723 = vld [vmem:[%s5 + $0x178] sm:$0xff]
    %724 = vmatprep.subr.mxu0 0.0
    %725 = vmatpush1.msra.mxu0 %v691
    %726 = vmatprep.subr.mxu0 0.0
    %727 = vmatpush1.msra.mxu0 %v690
    %728 = vmatprep.subr.mxu0 0.0
    %729 = vmatpush1.msra.mxu0 %v689
    %730 = vmatprep.subr.mxu0 0.0
    %731 = vmatpush1.msra.mxu0 %v688
    %732 = vmatprep.subr.mxu0 0.0
    %733 = vmatpush1.msra.mxu0 %v687
    %734 = vmatprep.subr.mxu0 0.0
    %735 = vmatpush1.msra.mxu0 %v686
    %736 = vmatprep.subr.mxu0 0.0
    %737 = vmatpush1.msra.mxu0 %v685
    %738 = vmatprep.subr.mxu0 0.0
    %739 = vmatpush1.msra.mxu0 %v684
    %740 = vmatprep.subr.mxu0 0.0
    %741 = vmatpush1.msra.mxu0 %v683
    %742 = vmatprep.subr.mxu0 0.0
    %743 = vmatpush1.msra.mxu0 %v682
    %744 = vmatprep.subr.mxu0 0.0
    %745 = vmatpush1.msra.mxu0 %v681
    %746 = vmatprep.subr.mxu0 0.0
    %747 = vmatpush1.msra.mxu0 %v680
    %748 = vmatprep.subr.mxu0 0.0
    %749 = vmatpush1.msra.mxu0 %v679
    %750 = vmatprep.subr.mxu0 0.0
    %751 = vmatpush1.msra.mxu0 %v678
    %752 = vmatprep.subr.mxu0 0.0
    %753 = vmatpush1.msra.mxu0 %v677
    %754 = vmatprep.subr.mxu0 0.0
    %755 = vmatpush1.msra.mxu0 %v676
    %756 = vmatprep.subr.mxu0 0.0
    %757 = vmatpush2.msra.mxu0 %v707
    %758 = vmatprep.subr.mxu0 0.0
    %759 = vmatpush2.msra.mxu0 %v706
    %760 = vmatprep.subr.mxu0 0.0
    %761 = vmatpush2.msra.mxu0 %v705
    %762 = vmatprep.subr.mxu0 0.0
    %763 = vmatpush2.msra.mxu0 %v704
    %764 = vmatprep.subr.mxu0 0.0
    %765 = vmatpush2.msra.mxu0 %v703
    %766 = vmatprep.subr.mxu0 0.0
    %767 = vmatpush2.msra.mxu0 %v702
    %768 = vmatprep.subr.mxu0 0.0
    %769 = vmatpush2.msra.mxu0 %v701
    %770 = vmatprep.subr.mxu0 0.0
    %771 = vmatpush2.msra.mxu0 %v700
    %772 = vmatprep.subr.mxu0 0.0
    %773 = vmatpush2.msra.mxu0 %v699
    %774 = vmatprep.subr.mxu0 0.0
    %775 = vmatpush2.msra.mxu0 %v698
    %776 = vmatprep.subr.mxu0 0.0
    %777 = vmatpush2.msra.mxu0 %v697
    %778 = vmatprep.subr.mxu0 0.0
    %779 = vmatpush2.msra.mxu0 %v696
    %780 = vmatprep.subr.mxu0 0.0
    %781 = vmatpush2.msra.mxu0 %v695
    %782 = vmatprep.subr.mxu0 0.0
    %783 = vmatpush2.msra.mxu0 %v694
    %784 = vmatprep.subr.mxu0 0.0
    %785 = vmatpush2.msra.mxu0 %v693
    %786 = vmatprep.subr.mxu0 0.0
    %787 = vmatpush2.msra.mxu0 %v692
    %788 = vmatprep.mubr.f32.mxu0 %v659
    %789 = vmatmul.mubr.f32.gmra.mxu0 %v658
    %v790 = vpop.f32.mrf.mxu0
    %v791 = vadd.f32 0.0, %v790
    %v792 = vpop.f32.mrf.mxu0
    %793 = vmatprep.mubr.f32.mxu0 %v661
    %794 = vmatmul.mubr.f32.gmra.mxu0 %v660
    %v795 = vpop.f32.mrf.mxu0
    %v796 = vadd.f32 0.0, %v795
    %v797 = vpop.f32.mrf.mxu0
    %798 = vdwg.mxu0
    %799 = vmatprep.subr.mxu0 0.0
    %800 = vmatpush1.msra.mxu0 %v723
    %801 = vmatprep.subr.mxu0 0.0
    %802 = vmatpush1.msra.mxu0 %v722
    %803 = vmatprep.subr.mxu0 0.0
    %804 = vmatpush1.msra.mxu0 %v721
    %805 = vmatprep.subr.mxu0 0.0
    %806 = vmatpush1.msra.mxu0 %v720
    %807 = vmatprep.subr.mxu0 0.0
    %808 = vmatpush1.msra.mxu0 %v719
    %809 = vmatprep.subr.mxu0 0.0
    %810 = vmatpush1.msra.mxu0 %v718
    %811 = vmatprep.subr.mxu0 0.0
    %812 = vmatpush1.msra.mxu0 %v717
    %813 = vmatprep.subr.mxu0 0.0
    %814 = vmatpush1.msra.mxu0 %v716
    %815 = vmatprep.subr.mxu0 0.0
    %816 = vmatpush1.msra.mxu0 %v715
    %817 = vmatprep.subr.mxu0 0.0
    %818 = vmatpush1.msra.mxu0 %v714
    %819 = vmatprep.subr.mxu0 0.0
    %820 = vmatpush1.msra.mxu0 %v713
    %821 = vmatprep.subr.mxu0 0.0
    %822 = vmatpush1.msra.mxu0 %v712
    %823 = vmatprep.subr.mxu0 0.0
    %824 = vmatpush1.msra.mxu0 %v711
    %825 = vmatprep.subr.mxu0 0.0
    %826 = vmatpush1.msra.mxu0 %v710
    %827 = vmatprep.subr.mxu0 0.0
    %828 = vmatpush1.msra.mxu0 %v709
    %829 = vmatprep.subr.mxu0 0.0
    %830 = vmatpush1.msra.mxu0 %v708
    %831 = vmatprep.subr.mxu0 0.0
    %832 = vmatpush2.msra.mxu0 0.0
    %833 = vmatprep.subr.mxu0 0.0
    %834 = vmatpush2.msra.mxu0 0.0
    %835 = vmatprep.subr.mxu0 0.0
    %836 = vmatpush2.msra.mxu0 0.0
    %837 = vmatprep.subr.mxu0 0.0
    %838 = vmatpush2.msra.mxu0 0.0
    %839 = vmatprep.subr.mxu0 0.0
    %840 = vmatpush2.msra.mxu0 0.0
    %841 = vmatprep.subr.mxu0 0.0
    %842 = vmatpush2.msra.mxu0 0.0
    %843 = vmatprep.subr.mxu0 0.0
    %844 = vmatpush2.msra.mxu0 0.0
    %845 = vmatprep.subr.mxu0 0.0
    %846 = vmatpush2.msra.mxu0 0.0
    %847 = vmatprep.subr.mxu0 0.0
    %848 = vmatpush2.msra.mxu0 0.0
    %849 = vmatprep.subr.mxu0 0.0
    %850 = vmatpush2.msra.mxu0 0.0
    %851 = vmatprep.subr.mxu0 0.0
    %852 = vmatpush2.msra.mxu0 0.0
    %853 = vmatprep.subr.mxu0 0.0
    %854 = vmatpush2.msra.mxu0 0.0
    %855 = vmatprep.subr.mxu0 0.0
    %856 = vmatpush2.msra.mxu0 0.0
    %857 = vmatprep.subr.mxu0 0.0
    %858 = vmatpush2.msra.mxu0 0.0
    %859 = vmatprep.subr.mxu0 0.0
    %860 = vmatpush2.msra.mxu0 0.0
    %861 = vmatprep.subr.mxu0 0.0
    %862 = vmatpush2.msra.mxu0 0.0
    %863 = vmatprep.mubr.f32.mxu0 0.0
    %864 = vmatmul.mubr.f32.gmra.mxu0 %v674
    %v865 = vpop.f32.mrf.mxu0
    %v866 = vadd.f32 %v791, %v865
    %v867 = vpop.f32.mrf.mxu0
    %868 = vmatprep.mubr.f32.mxu0 0.0
    %869 = vmatmul.mubr.f32.gmra.mxu0 %v675
    %v870 = vpop.f32.mrf.mxu0
    %v871 = vadd.f32 %v796, %v870
    %v872 = vpop.f32.mrf.mxu0
    %873 = vdwg.mxu0
    %874 = vst.msk [vmem:[#allocation2] sm:$0xff] %vm54, %v866
    %875 = vst.msk [vmem:[#allocation2 + $0x8] sm:$0xff] %vm54, %v871
    // Predicated region
    $region26: #{tpu_custom_call.1} parent=1 // pred_check
      _
    $region27: #{tpu_custom_call.1} parent=1 // pred_check_branch
      %877 = sbr.rel (0) target = $region29
    $region28: #{tpu_custom_call.1} parent=1 // pred_region
      %s879 = ssub.s32 256, 256
      %880 = vsyncadd [#allocation3], %s879
      %s881 = sshll.u32 [#allocation2], 4
      %s882 = int_to_ptr.vmem [resolvable:$true] %s881
      %887 = dma.vmem_to_hbm [thread:$0]  %s882, 256, %s6, [#allocation3], 128, 128, 8
    $region29: #{tpu_custom_call.1} parent=1 // pred_fallthru
      _
    // Predicated region
    $region30: #{tpu_custom_call.1} parent=1 // pred_check
      _
    $region31: #{tpu_custom_call.1} parent=1 // pred_check_branch
      %889 = sbr.rel (0) target = $region33
    $region32: #{tpu_custom_call.1} parent=1 // pred_region
      %890 = dma.done [#allocation3], 256
    $region33: #{tpu_custom_call.1} parent=1 // pred_fallthru
      _
    %891 = vsyncpa [#allocation3], 1

</llo_original>
